<compile_context>
chip_gen: v7x
topology: tpu7x:2x2x1
jax: 0.10.0
libtpu: 0.0.40
codegen_flags: <defaults>
</compile_context>

<pallas_src>
import functools

import jax
import jax.numpy as jnp
from jax.experimental import pallas as pl
from jax.experimental.pallas import tpu as pltpu

_LANE = 128
_SUBLANE = 8
_TILE_ROWS_MAX = 4096  # sweepable: 2048-8192 all fit comfortably in VMEM


def _disloss_kernel(x_ref, y_ref, out_ref, *, rows, tiles_per_core, tile_rows,
                    needs_mask):
    core = pl.program_id(0)
    j = pl.program_id(1)

    @pl.when(j == 0)
    def _():
        out_ref[...] = jnp.zeros_like(out_ref)

    d = x_ref[...].astype(jnp.float32) - y_ref[...].astype(jnp.float32)

    if needs_mask:
        # Logical (unclamped) position of this tile in the row range.  Blocks
        # whose logical start is past `rows` (clamped by the index_map to
        # re-read the last valid tile) are fully masked here; partial tail
        # blocks keep only their valid rows.
        row_start = (core * tiles_per_core + j) * tile_rows
        valid_rows = rows - row_start
        row_ids = jax.lax.broadcasted_iota(jnp.int32, d.shape, 0)
        d = jnp.where(row_ids < valid_rows, d, 0.0)

    sq = d * d

    # Fold (tile_rows, 128) -> (8, 128) with pure elementwise adds (VALU only;
    # the reshape groups whole (8,128) vreg tiles so it is layout-preserving).
    out_ref[...] += jnp.sum(sq.reshape(tile_rows // _SUBLANE, _SUBLANE, _LANE),
                            axis=0)


def dis_loss(x, y, loss_type=1, tile_rows_max=_TILE_ROWS_MAX):
    """Pallas implementation of DisLoss.forward."""
    if loss_type != 1:
        # PyTorch module returns None for any other type.
        return None

    b, c = x.shape[0], x.shape[1]
    total = x.size

    xf = jnp.reshape(x, (-1,))
    yf = jnp.reshape(y, (-1,))

    chunk = _SUBLANE * _LANE  # 1024
    if total % chunk != 0:
        # Rare fallback for awkward element counts: zero-pad (zero contribution
        # to the sum of squares).  Typical NCHW feature maps hit the pad-free
        # fast path above.
        pad = (-total) % chunk
        xf = jnp.pad(xf, (0, pad))
        yf = jnp.pad(yf, (0, pad))

    rows = xf.size // _LANE            # multiple of 8 by construction
    x2 = xf.reshape(rows, _LANE)       # free reshape of contiguous data
    y2 = yf.reshape(rows, _LANE)

    tile_rows = min(tile_rows_max, rows)
    tile_rows = max(_SUBLANE, (tile_rows // _SUBLANE) * _SUBLANE)
    total_tiles = pl.cdiv(rows, tile_rows)
    # Megacore split (v7x).  Harmless on 1-TC chips; skip entirely when there
    # is only one tile of work.
    n_cores = 2 if total_tiles >= 2 else 1
    tiles_per_core = pl.cdiv(total_tiles, n_cores)

    # Mask only when some logical block is partial or duplicated (clamped).
    needs_mask = (rows % tile_rows != 0) or (n_cores * tiles_per_core
                                             != total_tiles)

    def in_index(core, j):
        # Clamp so a fully-out-of-range logical block re-reads the last valid
        # tile (its contribution is masked to zero inside the kernel).
        g = jnp.minimum(core * tiles_per_core + j, total_tiles - 1)
        return (g, 0)

    kernel = functools.partial(
        _disloss_kernel,
        rows=rows,
        tiles_per_core=tiles_per_core,
        tile_rows=tile_rows,
        needs_mask=needs_mask,
    )

    partials = pl.pallas_call(
        kernel,
        out_shape=jax.ShapeDtypeStruct((n_cores, _SUBLANE, _LANE), jnp.float32),
        grid_spec=pltpu.PrefetchScalarGridSpec(
            num_scalar_prefetch=0,
            grid=(n_cores, tiles_per_core),
            in_specs=[
                pl.BlockSpec((tile_rows, _LANE), in_index),
                pl.BlockSpec((tile_rows, _LANE), in_index),
            ],
            out_specs=pl.BlockSpec((None, _SUBLANE, _LANE),
                                   lambda core, j: (core, 0, 0)),
        ),
        compiler_params=pltpu.CompilerParams(
            dimension_semantics=("parallel", "arbitrary"),
            vmem_limit_bytes=32 * 1024 * 1024,
        ),
    )(x2, y2)

    norm = jnp.sqrt(jnp.sum(partials))
    return norm / b / c


if __name__ == "__main__":
    key = jax.random.PRNGKey(0)
    kx, ky = jax.random.split(key)

    # NCHW inputs, matching the PyTorch convention.
    B, C, H, W = 2, 4, 16, 16
    x = jax.random.normal(kx, (B, C, H, W), dtype=jnp.float32)
    y = jax.random.normal(ky, (B, C, H, W), dtype=jnp.float32)

    out = dis_loss(x, y, loss_type=1)
    out = jax.block_until_ready(out)

    ref = jnp.sqrt(jnp.sum((x - y) ** 2)) / B / C
    assert jnp.allclose(out, ref, rtol=1e-5, atol=1e-6), (out, ref)

    # Second check: exercises the cdiv grid, partial-tile masking and the
    # fully-masked (clamped) block path by forcing small tiles.
    B2, C2, H2, W2 = 2, 4, 16, 40    # 5120 elems -> 40 rows of 128
    x2 = jax.random.normal(kx, (B2, C2, H2, W2), dtype=jnp.float32)
    y2 = jax.random.normal(ky, (B2, C2, H2, W2), dtype=jnp.float32)
    out2 = jax.block_until_ready(dis_loss(x2, y2, loss_type=1, tile_rows_max=16))
    ref2 = jnp.sqrt(jnp.sum((x2 - y2) ** 2)) / B2 / C2
    assert jnp.allclose(out2, ref2, rtol=1e-5, atol=1e-6), (out2, ref2)

    # Third check: bf16 inputs go through the in-kernel f32 cast path.
    x3 = x.astype(jnp.bfloat16)
    y3 = y.astype(jnp.bfloat16)
    out3 = jax.block_until_ready(dis_loss(x3, y3, loss_type=1))
    ref3 = jnp.sqrt(jnp.sum(
        (x3.astype(jnp.float32) - y3.astype(jnp.float32)) ** 2)) / B / C
    assert jnp.allclose(out3, ref3, rtol=1e-3, atol=1e-4), (out3, ref3)

    print("KERNEL_OK")
</pallas_src>

<mosaic_0001>
module attributes {stable_mosaic.version = 11 : i64} {
  func.func @_disloss_kernel(%arg0: i32, %arg1: i32, %arg2: memref<16x128xf32, #tpu.memory_space<vmem>>, %arg3: memref<16x128xf32, #tpu.memory_space<vmem>>, %arg4: memref<1x8x128xf32, #tpu.memory_space<vmem>>) attributes {dimension_semantics = [#tpu.dimension_semantics<parallel>, #tpu.dimension_semantics<arbitrary>], iteration_bounds = array<i64: 1, 1>, scalar_prefetch = 0 : i64, scratch_operands = 0 : i64, tpu.core_type = #tpu.core_type<tc>, window_params = [{transform_indices = @transform_0, window_bounds = array<i64: 16, 128>}, {transform_indices = @transform_1, window_bounds = array<i64: 16, 128>}, {transform_indices = @transform_2, window_bounds = array<i64: 1, 8, 128>}]} {
    %c0_i32 = arith.constant 0 : i32
    %0 = arith.cmpi eq, %arg1, %c0_i32 : i32
    %1 = arith.extui %0 : i1 to i32
    %c0_i32_0 = arith.constant 0 : i32
    %2 = arith.cmpi ne, %1, %c0_i32_0 : i32
    scf.if %2 {
      %cst_10 = arith.constant 0.000000e+00 : f32
      %15 = vector.broadcast %cst_10 : f32 to vector<8x128xf32>
      %c0_11 = arith.constant 0 : index
      %c0_12 = arith.constant 0 : index
      %c0_13 = arith.constant 0 : index
      %16 = vector.load %arg4[%c0_11, %c0_12, %c0_13] : memref<1x8x128xf32, #tpu.memory_space<vmem>>, vector<1x8x128xf32>
      %17 = vector.shape_cast %16 : vector<1x8x128xf32> to vector<8x128xf32>
      %18 = vector.shape_cast %15 : vector<8x128xf32> to vector<1x8x128xf32>
      tpu.vector_store %arg4[%c0_11, %c0_12, %c0_13], %18 {strides = array<i32>} : memref<1x8x128xf32, #tpu.memory_space<vmem>>, vector<1x8x128xf32>,
    } else {
    }
    %c0 = arith.constant 0 : index
    %c0_1 = arith.constant 0 : index
    %3 = vector.load %arg2[%c0, %c0_1] : memref<16x128xf32, #tpu.memory_space<vmem>>, vector<16x128xf32>
    %c0_2 = arith.constant 0 : index
    %c0_3 = arith.constant 0 : index
    %4 = vector.load %arg3[%c0_2, %c0_3] : memref<16x128xf32, #tpu.memory_space<vmem>>, vector<16x128xf32>
    %5 = arith.subf %3, %4 : vector<16x128xf32>
    %6 = arith.mulf %5, %5 : vector<16x128xf32>
    %c0_4 = arith.constant 0 : index
    %c0_5 = arith.constant 0 : index
    %c0_6 = arith.constant 0 : index
    %7 = vector.load %arg4[%c0_4, %c0_5, %c0_6] : memref<1x8x128xf32, #tpu.memory_space<vmem>>, vector<1x8x128xf32>
    %8 = vector.shape_cast %7 : vector<1x8x128xf32> to vector<8x128xf32>
    %9 = vector.shape_cast %6 : vector<16x128xf32> to vector<2x8x128xf32>
    %cst = arith.constant dense<0.000000e+00> : vector<8x128xf32>
    %10 = vector.multi_reduction <add>, %9, %cst [0] : vector<2x8x128xf32> to vector<8x128xf32>
    %11 = arith.addf %8, %10 : vector<8x128xf32>
    %c0_7 = arith.constant 0 : index
    %c0_8 = arith.constant 0 : index
    %c0_9 = arith.constant 0 : index
    %12 = vector.load %arg4[%c0_7, %c0_8, %c0_9] : memref<1x8x128xf32, #tpu.memory_space<vmem>>, vector<1x8x128xf32>
    %13 = vector.shape_cast %12 : vector<1x8x128xf32> to vector<8x128xf32>
    %14 = vector.shape_cast %11 : vector<8x128xf32> to vector<1x8x128xf32>
    tpu.vector_store %arg4[%c0_7, %c0_8, %c0_9], %14 {strides = array<i32>} : memref<1x8x128xf32, #tpu.memory_space<vmem>>, vector<1x8x128xf32>,
    return
  }
  func.func @transform_0(%arg0: i32, %arg1: i32) -> (i32, i32) {
    %c1_i32 = arith.constant 1 : i32
    %0 = arith.muli %arg0, %c1_i32 : i32
    %1 = arith.addi %0, %arg1 : i32
    %c0_i32 = arith.constant 0 : i32
    %2 = arith.minsi %1, %c0_i32 : i32
    %c0_i32_0 = arith.constant 0 : i32
    %c0_i32_1 = arith.constant 0 : i32
    return %2, %c0_i32_0 : i32, i32
  }
  func.func @transform_1(%arg0: i32, %arg1: i32) -> (i32, i32) {
    %c1_i32 = arith.constant 1 : i32
    %0 = arith.muli %arg0, %c1_i32 : i32
    %1 = arith.addi %0, %arg1 : i32
    %c0_i32 = arith.constant 0 : i32
    %2 = arith.minsi %1, %c0_i32 : i32
    %c0_i32_0 = arith.constant 0 : i32
    %c0_i32_1 = arith.constant 0 : i32
    return %2, %c0_i32_0 : i32, i32
  }
  func.func @transform_2(%arg0: i32, %arg1: i32) -> (i32, i32, i32) {
    %c0_i32 = arith.constant 0 : i32
    %c0_i32_0 = arith.constant 0 : i32
    %c0_i32_1 = arith.constant 0 : i32
    return %arg0, %c0_i32, %c0_i32_0 : i32, i32, i32
  }
}

</mosaic_0001>

<llo_original>
// kernel: tpu_custom_call.1
$region0: #{tpu_custom_call.1}
  #allocation0 [shape = 'u32[]', space=smem, size = 0x4, offset = 0x4, fixed_abs, tag = 'smem constant byte address 0x4 - core index']
  #allocation1 [shape = 'u32[144,128]{1,0:T(1,128)}', space=vmem, size = 0x12000, scoped, tag = 'internal scratch']
  %s0 = inlined_call_operand.hbm [shape: f32[16,128], index: 0, kind: input, shape index: {}]
  %s1 = inlined_call_operand.hbm [shape: f32[16,128], index: 1, kind: input, shape index: {}]
  %s2 = inlined_call_operand.hbm [shape: f32[1,8,128], index: 2, kind: output, shape index: {}]
  %s3 = sld [smem:[#allocation0]]
  $region30: #{tpu_custom_call.1} parent=0
    _
  %s5 = ssub.s32 1, %s3
  %s6 = scalar_select 0, %s5, %s3
  $region1: #{tpu_custom_call.1} parent=0
    #allocation2 [shape = 'u8[8192]{0}', space=vmem, size = 0x2000, scoped, tag = 'input window, operand 0, single buffered']
    #allocation3 [shape = 's32[1]{0}', space=sflag, size = 0x4, scoped, tag = 'scoped memory for tpu_custom_call.1']
    #allocation4 [shape = 's32[1]{0}', space=sflag, size = 0x4, scoped, tag = 'scoped memory for tpu_custom_call.1']
    #allocation5 [shape = 'u8[8192]{0}', space=vmem, size = 0x2000, scoped, tag = 'input window, operand 1, single buffered']
    #allocation6 [shape = 's32[1]{0}', space=sflag, size = 0x4, scoped, tag = 'scoped memory for tpu_custom_call.1']
    #allocation7 [shape = 'u8[4096]{0}', space=vmem, size = 0x1000, scoped, tag = 'output window, operand 0, single buffered']
    %7 = vsyncpa [#allocation3], 0
    %8 = vsyncpa [#allocation6], 0
    %9 = vsyncpa [#allocation4], 0
    // Predicated region
    $region2: #{tpu_custom_call.1} parent=1 // pred_check
      _
    $region3: #{tpu_custom_call.1} parent=1 // pred_check_branch
      %11 = sbr.rel (0) target = $region5
    $region4: #{tpu_custom_call.1} parent=1 // pred_region
      %s12 = sadd.s32 0, 0
      %p13 = scmp.lt.s32.totalorder %s12, 0
      %s14 = scalar_select %p13, %s12, 0
      %s15 = smul.u32 2, %s14
      %s17 = ssub.s32 256, 256
      %18 = vsyncadd [#allocation3], %s17
      %s19 = smul.addr %s15, 128
      %s20 = scalar_lea.hbm %s0, %s19
      %s21 = sshll.u32 [#allocation2], 4
      %s22 = int_to_ptr.vmem [resolvable:$true] %s21
      %27 = dma.hbm_to_vmem [thread:$0]  %s20, 256, %s22, [#allocation3], 128, 128, 8
    $region5: #{tpu_custom_call.1} parent=1 // pred_fallthru
      _
    // Predicated region
    $region6: #{tpu_custom_call.1} parent=1 // pred_check
      _
    $region7: #{tpu_custom_call.1} parent=1 // pred_check_branch
      %29 = sbr.rel (0) target = $region9
    $region8: #{tpu_custom_call.1} parent=1 // pred_region
      %s30 = sadd.s32 0, 0
      %p31 = scmp.lt.s32.totalorder %s30, 0
      %s32 = scalar_select %p31, %s30, 0
      %s33 = smul.u32 2, %s32
      %s35 = ssub.s32 256, 256
      %36 = vsyncadd [#allocation6], %s35
      %s37 = smul.addr %s33, 128
      %s38 = scalar_lea.hbm %s1, %s37
      %s39 = sshll.u32 [#allocation5], 4
      %s40 = int_to_ptr.vmem [resolvable:$true] %s39
      %45 = dma.hbm_to_vmem [thread:$0]  %s38, 256, %s40, [#allocation6], 128, 128, 8
    $region9: #{tpu_custom_call.1} parent=1 // pred_fallthru
      _
    // Predicated region
    $region10: #{tpu_custom_call.1} parent=1 // pred_check
      _
    $region11: #{tpu_custom_call.1} parent=1 // pred_check_branch
      %47 = sbr.rel (0) target = $region13
    $region12: #{tpu_custom_call.1} parent=1 // pred_region
      %48 = dma.done [#allocation3], 256
    $region13: #{tpu_custom_call.1} parent=1 // pred_fallthru
      _
    // Predicated region
    $region14: #{tpu_custom_call.1} parent=1 // pred_check
      _
    $region15: #{tpu_custom_call.1} parent=1 // pred_check_branch
      %50 = sbr.rel (0) target = $region17
    $region16: #{tpu_custom_call.1} parent=1 // pred_region
      %51 = dma.done [#allocation6], 256
    $region17: #{tpu_custom_call.1} parent=1 // pred_fallthru
      _
    %s52 = sadd.s32 0, 0
    %p53 = scmp.lt.s32.totalorder %s52, 0
    %s54 = scalar_select %p53, %s52, 0
    %s55 = smul.u32 2, %s54
    %s56 = sadd.s32 0, 0
    %p57 = scmp.lt.s32.totalorder %s56, 0
    %s58 = scalar_select %p57, %s56, 0
    %s59 = smul.u32 2, %s58
    %p60 = scmp.eq.s32.totalorder 0, 0
    // Predicated region
    $region18: #{tpu_custom_call.1} parent=1 // pred_check
      %p61 = pneg %p60
    $region19: #{tpu_custom_call.1} parent=1 // pred_check_branch
      %63 = sbr.rel (%p61) target = $region21
    $region20: #{tpu_custom_call.1} parent=1 // pred_region
      %64 = vst [vmem:[#allocation7] sm:$0xff] 0.0
    $region21: #{tpu_custom_call.1} parent=1 // pred_fallthru
      _
    %v65 = vld [vmem:[#allocation2] sm:$0xff]
    %v66 = vld [vmem:[#allocation2 + $0x8] sm:$0xff]
    %v67 = vld [vmem:[#allocation5] sm:$0xff]
    %v68 = vld [vmem:[#allocation5 + $0x8] sm:$0xff]
    %v69 = vsub.f32 %v65, %v67
    %v70 = vsub.f32 %v66, %v68
    %v71 = vmul.f32 %v69, %v69
    %v72 = vmul.f32 %v70, %v70
    %v73 = vld [vmem:[#allocation7] sm:$0xff]
    %v74 = vadd.f32 %v71, %v72
    %v75 = vadd.f32 %v73, %v74
    %76 = vst [vmem:[#allocation7] sm:$0xff] %v75
    // Predicated region
    $region22: #{tpu_custom_call.1} parent=1 // pred_check
      _
    $region23: #{tpu_custom_call.1} parent=1 // pred_check_branch
      %78 = sbr.rel (0) target = $region25
    $region24: #{tpu_custom_call.1} parent=1 // pred_region
      %s80 = ssub.s32 128, 128
      %81 = vsyncadd [#allocation4], %s80
      %s83 = sshll.u32 [#allocation7], 4
      %s84 = int_to_ptr.vmem [resolvable:$true] %s83
      %86 = dma.vmem_to_hbm [thread:$0]  %s84, 128, %s2, [#allocation4]
    $region25: #{tpu_custom_call.1} parent=1 // pred_fallthru
      _
    // Predicated region
    $region26: #{tpu_custom_call.1} parent=1 // pred_check
      _
    $region27: #{tpu_custom_call.1} parent=1 // pred_check_branch
      %88 = sbr.rel (0) target = $region29
    $region28: #{tpu_custom_call.1} parent=1 // pred_region
      %89 = dma.done [#allocation4], 128
    $region29: #{tpu_custom_call.1} parent=1 // pred_fallthru
      _
    %90 = vsyncpa [#allocation3], 1
    %91 = vsyncpa [#allocation6], 1
    %92 = vsyncpa [#allocation4], 1

</llo_original>
